<compile_context>
chip_gen: v5e
topology: v5e:2x2
jax: 0.10.0
libtpu: 0.0.40
codegen_flags: <defaults>
</compile_context>

<pallas_src>
import functools

import jax
import jax.numpy as jnp
from jax import lax
from jax.experimental import pallas as pl
from jax.experimental.pallas import tpu as pltpu


def _round_up(n, m):
    return (n + m - 1) // m * m


def _rnn_chunk_kernel(xf_ref, wih_ref, whh_ref, b_ref, wfc_ref, bfc_ref,
                      out_ref, xph_ref, hcarry_ref, *, t_chunk, batch_p):
    """One sequence chunk of the RNN forward.

    xf_ref  : (T*B_pad, H)  seq-major flattened inputs for this chunk
    xph_ref : (T*B_pad, H)  f32 VMEM scratch; holds xp, then the hidden states
    hcarry_ref : (B_pad, H) f32 VMEM scratch; hidden state carried across chunks
    out_ref : (T*B_pad, O_pad)  lane-dense output block
    """
    # Zero the carried hidden state only on the first chunk of the sequence.
    @pl.when(pl.program_id(0) == 0)
    def _():
        hcarry_ref[...] = jnp.zeros_like(hcarry_ref)

    # Hoist every weight / bias load out of the recurrence (one vld each).
    wih = wih_ref[...]
    whh = whh_ref[...]
    b = b_ref[...]
    wfc = wfc_ref[...]
    bfc = bfc_ref[...]

    # (1) Non-recurrent input projection for the whole chunk as ONE GEMM,
    #     staged in VMEM (off the serial chain, no vreg-resident slab):
    #     xp = x @ W_ih^T + (b_ih + b_hh)
    xph_ref[...] = (
        jnp.dot(xf_ref[...], wih, preferred_element_type=jnp.float32) + b)

    # (2) Serial recurrence over the chunk.  Per-step slabs are sublane-
    #     aligned (B_pad % 8 == 0); xp_t rows are overwritten in place by h_t.
    def step(t, h):
        off = pl.multiple_of(t * batch_p, batch_p)
        xp_t = xph_ref[pl.ds(off, batch_p), :]
        h = jnp.tanh(
            xp_t + jnp.dot(h, whh, preferred_element_type=jnp.float32))
        xph_ref[pl.ds(off, batch_p), :] = h
        return h

    h = lax.fori_loop(0, t_chunk, step, hcarry_ref[...],
                      unroll=min(8, t_chunk))
    hcarry_ref[...] = h

    # (3) Linear head: ONE GEMM over the whole chunk, single lane-dense store.
    out_ref[...] = (
        jnp.dot(xph_ref[...], wfc, preferred_element_type=jnp.float32) + bfc
    ).astype(out_ref.dtype)


def rnn_forward(x, w_ih, w_hh, b_combined, w_fc, b_fc, *, t_chunk=8):
    """x: (B, S, H). Weights already in right-multiply (transposed) layout:
       w_ih: (H, H), w_hh: (H, H), b_combined: (H,) or (1, H) = b_ih + b_hh,
       w_fc: (H, O), b_fc: (O,) or (1, O).  Returns (B, S, O)."""
    B, S, H = x.shape
    O = w_fc.shape[1]

    B_pad = _round_up(B, 8)        # sublane-aligned per-timestep slabs
    O_pad = _round_up(O, 128)      # lane-dense output store / writeback
    S_pad = _round_up(S, t_chunk)
    n_chunks = S_pad // t_chunk

    # Seq-major flatten + pad so timestep t occupies rows [t*B_pad, (t+1)*B_pad).
    xf = jnp.transpose(x, (1, 0, 2))                              # (S, B, H)
    xf = jnp.pad(xf, ((0, S_pad - S), (0, B_pad - B), (0, 0)))
    xf = xf.reshape(S_pad * B_pad, H)

    wfc_p = jnp.pad(w_fc, ((0, 0), (0, O_pad - O)))
    bfc_p = jnp.pad(b_fc.reshape(1, O), ((0, 0), (0, O_pad - O)))
    b2 = b_combined.reshape(1, H)

    kernel = functools.partial(_rnn_chunk_kernel,
                               t_chunk=t_chunk, batch_p=B_pad)

    out = pl.pallas_call(
        kernel,
        out_shape=jax.ShapeDtypeStruct((S_pad * B_pad, O_pad), x.dtype),
        grid_spec=pltpu.PrefetchScalarGridSpec(
            num_scalar_prefetch=0,
            grid=(n_chunks,),  # sequence chunks stream through the pipeline
            in_specs=[
                pl.BlockSpec((t_chunk * B_pad, H), lambda c: (c, 0)),  # x chunk
                pl.BlockSpec((H, H), lambda c: (0, 0)),                # W_ih^T
                pl.BlockSpec((H, H), lambda c: (0, 0)),                # W_hh^T
                pl.BlockSpec((1, H), lambda c: (0, 0)),                # b_ih+b_hh
                pl.BlockSpec((H, O_pad), lambda c: (0, 0)),            # W_fc^T
                pl.BlockSpec((1, O_pad), lambda c: (0, 0)),            # b_fc
            ],
            out_specs=pl.BlockSpec((t_chunk * B_pad, O_pad), lambda c: (c, 0)),
            scratch_shapes=[
                pltpu.VMEM((t_chunk * B_pad, H), jnp.float32),  # xp / hidden
                pltpu.VMEM((B_pad, H), jnp.float32),            # carried h
            ],
        ),
        compiler_params=pltpu.CompilerParams(
            # Serial dependence across chunks through the carried h scratch.
            dimension_semantics=("arbitrary",),
        ),
    )(xf, w_ih, w_hh, b2, wfc_p, bfc_p)

    out = out.reshape(S_pad, B_pad, O_pad)[:S, :B, :O]   # strip padding
    return jnp.transpose(out, (1, 0, 2))                 # (B, S, O)


def reference_forward(x, w_ih, w_hh, b_combined, w_fc, b_fc):
    """Pure-JAX reference (lax.scan) matching nn.RNN + nn.Linear semantics."""
    B, S, H = x.shape

    def step(h, x_t):
        h_new = jnp.tanh(x_t @ w_ih + h @ w_hh + b_combined)
        return h_new, h_new

    h0 = jnp.zeros((B, H), jnp.float32)
    _, hs = jax.lax.scan(step, h0, jnp.transpose(x, (1, 0, 2)))  # (S, B, H)
    hs = jnp.transpose(hs, (1, 0, 2))                            # (B, S, H)
    return hs @ w_fc + b_fc


if __name__ == "__main__":
    # Module config: hidden_size = input_size
    batch, seq, input_size, output_size = 2, 8, 32, 16
    hidden_size = input_size

    key = jax.random.PRNGKey(0)
    k = jax.random.split(key, 8)
    bound = 1.0 / jnp.sqrt(hidden_size)

    # Deterministic "PyTorch-like" uniform init of all parameters.
    # Stored directly in right-multiply layout (i.e. already transposed).
    w_ih = jax.random.uniform(k[0], (hidden_size, hidden_size), jnp.float32, -bound, bound)
    w_hh = jax.random.uniform(k[1], (hidden_size, hidden_size), jnp.float32, -bound, bound)
    b_ih = jax.random.uniform(k[2], (hidden_size,), jnp.float32, -bound, bound)
    b_hh = jax.random.uniform(k[3], (hidden_size,), jnp.float32, -bound, bound)
    w_fc = jax.random.uniform(k[4], (hidden_size, output_size), jnp.float32, -bound, bound)
    b_fc = jax.random.uniform(k[5], (output_size,), jnp.float32, -bound, bound)

    b_combined = b_ih + b_hh

    x = jax.random.normal(k[6], (batch, seq, input_size), jnp.float32)

    # t_chunk=4 -> 2 grid steps, exercising the cross-chunk hidden-state carry.
    out = rnn_forward(x, w_ih, w_hh, b_combined, w_fc, b_fc, t_chunk=4)
    out = jax.block_until_ready(out)

    ref = reference_forward(x, w_ih, w_hh, b_combined, w_fc, b_fc)
    assert out.shape == (batch, seq, output_size)
    assert jnp.allclose(out, ref, atol=1e-5, rtol=1e-5), "mismatch vs JAX reference"

    print("KERNEL_OK")
</pallas_src>

<mosaic_0001>
module attributes {stable_mosaic.version = 11 : i64} {
  func.func @_rnn_chunk_kernel(%arg0: i32, %arg1: memref<32x32xf32, #tpu.memory_space<vmem>>, %arg2: memref<32x32xf32, #tpu.memory_space<vmem>>, %arg3: memref<32x32xf32, #tpu.memory_space<vmem>>, %arg4: memref<1x32xf32, #tpu.memory_space<vmem>>, %arg5: memref<32x128xf32, #tpu.memory_space<vmem>>, %arg6: memref<1x128xf32, #tpu.memory_space<vmem>>, %arg7: memref<32x128xf32, #tpu.memory_space<vmem>>, %arg8: memref<32x32xf32, #tpu.memory_space<vmem>>, %arg9: memref<8x32xf32, #tpu.memory_space<vmem>>) attributes {dimension_semantics = [#tpu.dimension_semantics<arbitrary>], iteration_bounds = array<i64: 2>, scalar_prefetch = 0 : i64, scratch_operands = 2 : i64, tpu.core_type = #tpu.core_type<tc>, window_params = [{transform_indices = @transform_0, window_bounds = array<i64: 32, 32>}, {pipeline_mode = #tpu.pipeline_mode<synchronous>, transform_indices = @transform_1, window_bounds = array<i64: 32, 32>}, {pipeline_mode = #tpu.pipeline_mode<synchronous>, transform_indices = @transform_2, window_bounds = array<i64: 32, 32>}, {pipeline_mode = #tpu.pipeline_mode<synchronous>, transform_indices = @transform_3, window_bounds = array<i64: 1, 32>}, {pipeline_mode = #tpu.pipeline_mode<synchronous>, transform_indices = @transform_4, window_bounds = array<i64: 32, 128>}, {pipeline_mode = #tpu.pipeline_mode<synchronous>, transform_indices = @transform_5, window_bounds = array<i64: 1, 128>}, {transform_indices = @transform_6, window_bounds = array<i64: 32, 128>}]} {
    %c0_i32 = arith.constant 0 : i32
    %0 = arith.cmpi eq, %arg0, %c0_i32 : i32
    %1 = arith.extui %0 : i1 to i32
    %c0_i32_0 = arith.constant 0 : i32
    %2 = arith.cmpi ne, %1, %c0_i32_0 : i32
    scf.if %2 {
      %cst_39 = arith.constant 0.000000e+00 : f32
      %56 = vector.broadcast %cst_39 : f32 to vector<8x32xf32>
      %c0_40 = arith.constant 0 : index
      %c0_41 = arith.constant 0 : index
      %57 = vector.load %arg9[%c0_40, %c0_41] : memref<8x32xf32, #tpu.memory_space<vmem>>, vector<8x32xf32>
      tpu.vector_store %arg9[%c0_40, %c0_41], %56 {strides = array<i32>} : memref<8x32xf32, #tpu.memory_space<vmem>>, vector<8x32xf32>,
    } else {
    }
    %c0 = arith.constant 0 : index
    %c0_1 = arith.constant 0 : index
    %3 = vector.load %arg2[%c0, %c0_1] : memref<32x32xf32, #tpu.memory_space<vmem>>, vector<32x32xf32>
    %c0_2 = arith.constant 0 : index
    %c0_3 = arith.constant 0 : index
    %4 = vector.load %arg3[%c0_2, %c0_3] : memref<32x32xf32, #tpu.memory_space<vmem>>, vector<32x32xf32>
    %c0_4 = arith.constant 0 : index
    %c0_5 = arith.constant 0 : index
    %5 = vector.load %arg4[%c0_4, %c0_5] : memref<1x32xf32, #tpu.memory_space<vmem>>, vector<1x32xf32>
    %c0_6 = arith.constant 0 : index
    %c0_7 = arith.constant 0 : index
    %6 = vector.load %arg5[%c0_6, %c0_7] : memref<32x128xf32, #tpu.memory_space<vmem>>, vector<32x128xf32>
    %c0_8 = arith.constant 0 : index
    %c0_9 = arith.constant 0 : index
    %7 = vector.load %arg6[%c0_8, %c0_9] : memref<1x128xf32, #tpu.memory_space<vmem>>, vector<1x128xf32>
    %c0_10 = arith.constant 0 : index
    %c0_11 = arith.constant 0 : index
    %8 = vector.load %arg1[%c0_10, %c0_11] : memref<32x32xf32, #tpu.memory_space<vmem>>, vector<32x32xf32>
    %cst = arith.constant dense<0.000000e+00> : vector<32x32xf32>
    %9 = tpu.matmul %8, %3, %cst {dimension_numbers = #tpu.dot_dimension_numbers<[1], [0], [0], [1], [0, 0, 1, 1], [], []>} : vector<32x32xf32>, vector<32x32xf32>, vector<32x32xf32> -> vector<32x32xf32>
    %10 = vector.broadcast %5 : vector<1x32xf32> to vector<32x32xf32>
    %11 = arith.addf %9, %10 : vector<32x32xf32>
    %c0_12 = arith.constant 0 : index
    %c0_13 = arith.constant 0 : index
    %12 = vector.load %arg8[%c0_12, %c0_13] : memref<32x32xf32, #tpu.memory_space<vmem>>, vector<32x32xf32>
    tpu.vector_store %arg8[%c0_12, %c0_13], %11 {strides = array<i32>} : memref<32x32xf32, #tpu.memory_space<vmem>>, vector<32x32xf32>,
    %c0_14 = arith.constant 0 : index
    %c0_15 = arith.constant 0 : index
    %13 = vector.load %arg9[%c0_14, %c0_15] : memref<8x32xf32, #tpu.memory_space<vmem>>, vector<8x32xf32>
    %c0_i32_16 = arith.constant 0 : i32
    %c8_i32 = arith.constant 8 : i32
    %14 = arith.muli %c0_i32_16, %c8_i32 : i32
    %15 = tpu.assume_multiple %14, 8 : i32
    %16 = arith.index_cast %15 : i32 to index
    %c0_17 = arith.constant 0 : index
    %17 = vector.load %arg8[%16, %c0_17] : memref<32x32xf32, #tpu.memory_space<vmem>>, vector<8x32xf32>
    %cst_18 = arith.constant dense<0.000000e+00> : vector<8x32xf32>
    %18 = tpu.matmul %13, %4, %cst_18 {dimension_numbers = #tpu.dot_dimension_numbers<[1], [0], [0], [1], [0, 0, 1, 1], [], []>} : vector<8x32xf32>, vector<32x32xf32>, vector<8x32xf32> -> vector<8x32xf32>
    %19 = arith.addf %17, %18 : vector<8x32xf32>
    %20 = math.tanh %19 : vector<8x32xf32>
    %21 = arith.index_cast %15 : i32 to index
    %c0_19 = arith.constant 0 : index
    %22 = vector.load %arg8[%21, %c0_19] : memref<32x32xf32, #tpu.memory_space<vmem>>, vector<8x32xf32>
    tpu.vector_store %arg8[%21, %c0_19], %20 {strides = array<i32>} : memref<32x32xf32, #tpu.memory_space<vmem>>, vector<8x32xf32>,
    %c1_i32 = arith.constant 1 : i32
    %c8_i32_20 = arith.constant 8 : i32
    %23 = arith.muli %c1_i32, %c8_i32_20 : i32
    %24 = tpu.assume_multiple %23, 8 : i32
    %25 = arith.index_cast %24 : i32 to index
    %c0_21 = arith.constant 0 : index
    %26 = vector.load %arg8[%25, %c0_21] : memref<32x32xf32, #tpu.memory_space<vmem>>, vector<8x32xf32>
    %cst_22 = arith.constant dense<0.000000e+00> : vector<8x32xf32>
    %27 = tpu.matmul %20, %4, %cst_22 {dimension_numbers = #tpu.dot_dimension_numbers<[1], [0], [0], [1], [0, 0, 1, 1], [], []>} : vector<8x32xf32>, vector<32x32xf32>, vector<8x32xf32> -> vector<8x32xf32>
    %28 = arith.addf %26, %27 : vector<8x32xf32>
    %29 = math.tanh %28 : vector<8x32xf32>
    %30 = arith.index_cast %24 : i32 to index
    %c0_23 = arith.constant 0 : index
    %31 = vector.load %arg8[%30, %c0_23] : memref<32x32xf32, #tpu.memory_space<vmem>>, vector<8x32xf32>
    tpu.vector_store %arg8[%30, %c0_23], %29 {strides = array<i32>} : memref<32x32xf32, #tpu.memory_space<vmem>>, vector<8x32xf32>,
    %c2_i32 = arith.constant 2 : i32
    %c8_i32_24 = arith.constant 8 : i32
    %32 = arith.muli %c2_i32, %c8_i32_24 : i32
    %33 = tpu.assume_multiple %32, 8 : i32
    %34 = arith.index_cast %33 : i32 to index
    %c0_25 = arith.constant 0 : index
    %35 = vector.load %arg8[%34, %c0_25] : memref<32x32xf32, #tpu.memory_space<vmem>>, vector<8x32xf32>
    %cst_26 = arith.constant dense<0.000000e+00> : vector<8x32xf32>
    %36 = tpu.matmul %29, %4, %cst_26 {dimension_numbers = #tpu.dot_dimension_numbers<[1], [0], [0], [1], [0, 0, 1, 1], [], []>} : vector<8x32xf32>, vector<32x32xf32>, vector<8x32xf32> -> vector<8x32xf32>
    %37 = arith.addf %35, %36 : vector<8x32xf32>
    %38 = math.tanh %37 : vector<8x32xf32>
    %39 = arith.index_cast %33 : i32 to index
    %c0_27 = arith.constant 0 : index
    %40 = vector.load %arg8[%39, %c0_27] : memref<32x32xf32, #tpu.memory_space<vmem>>, vector<8x32xf32>
    tpu.vector_store %arg8[%39, %c0_27], %38 {strides = array<i32>} : memref<32x32xf32, #tpu.memory_space<vmem>>, vector<8x32xf32>,
    %c3_i32 = arith.constant 3 : i32
    %c8_i32_28 = arith.constant 8 : i32
    %41 = arith.muli %c3_i32, %c8_i32_28 : i32
    %42 = tpu.assume_multiple %41, 8 : i32
    %43 = arith.index_cast %42 : i32 to index
    %c0_29 = arith.constant 0 : index
    %44 = vector.load %arg8[%43, %c0_29] : memref<32x32xf32, #tpu.memory_space<vmem>>, vector<8x32xf32>
    %cst_30 = arith.constant dense<0.000000e+00> : vector<8x32xf32>
    %45 = tpu.matmul %38, %4, %cst_30 {dimension_numbers = #tpu.dot_dimension_numbers<[1], [0], [0], [1], [0, 0, 1, 1], [], []>} : vector<8x32xf32>, vector<32x32xf32>, vector<8x32xf32> -> vector<8x32xf32>
    %46 = arith.addf %44, %45 : vector<8x32xf32>
    %47 = math.tanh %46 : vector<8x32xf32>
    %48 = arith.index_cast %42 : i32 to index
    %c0_31 = arith.constant 0 : index
    %49 = vector.load %arg8[%48, %c0_31] : memref<32x32xf32, #tpu.memory_space<vmem>>, vector<8x32xf32>
    tpu.vector_store %arg8[%48, %c0_31], %47 {strides = array<i32>} : memref<32x32xf32, #tpu.memory_space<vmem>>, vector<8x32xf32>,
    %c4_i32 = arith.constant 4 : i32
    %c0_32 = arith.constant 0 : index
    %c0_33 = arith.constant 0 : index
    %50 = vector.load %arg9[%c0_32, %c0_33] : memref<8x32xf32, #tpu.memory_space<vmem>>, vector<8x32xf32>
    tpu.vector_store %arg9[%c0_32, %c0_33], %47 {strides = array<i32>} : memref<8x32xf32, #tpu.memory_space<vmem>>, vector<8x32xf32>,
    %c0_34 = arith.constant 0 : index
    %c0_35 = arith.constant 0 : index
    %51 = vector.load %arg8[%c0_34, %c0_35] : memref<32x32xf32, #tpu.memory_space<vmem>>, vector<32x32xf32>
    %cst_36 = arith.constant dense<0.000000e+00> : vector<32x128xf32>
    %52 = tpu.matmul %51, %6, %cst_36 {dimension_numbers = #tpu.dot_dimension_numbers<[1], [0], [0], [1], [0, 0, 1, 1], [], []>} : vector<32x32xf32>, vector<32x128xf32>, vector<32x128xf32> -> vector<32x128xf32>
    %53 = vector.broadcast %7 : vector<1x128xf32> to vector<32x128xf32>
    %54 = arith.addf %52, %53 : vector<32x128xf32>
    %c0_37 = arith.constant 0 : index
    %c0_38 = arith.constant 0 : index
    %55 = vector.load %arg7[%c0_37, %c0_38] : memref<32x128xf32, #tpu.memory_space<vmem>>, vector<32x128xf32>
    tpu.vector_store %arg7[%c0_37, %c0_38], %54 {strides = array<i32>} : memref<32x128xf32, #tpu.memory_space<vmem>>, vector<32x128xf32>,
    return
  }
  func.func @transform_0(%arg0: i32) -> (i32, i32) {
    %c0_i32 = arith.constant 0 : i32
    %c0_i32_0 = arith.constant 0 : i32
    return %arg0, %c0_i32 : i32, i32
  }
  func.func @transform_1(%arg0: i32) -> (i32, i32) {
    %c0_i32 = arith.constant 0 : i32
    %c0_i32_0 = arith.constant 0 : i32
    %c0_i32_1 = arith.constant 0 : i32
    return %c0_i32, %c0_i32_0 : i32, i32
  }
  func.func @transform_2(%arg0: i32) -> (i32, i32) {
    %c0_i32 = arith.constant 0 : i32
    %c0_i32_0 = arith.constant 0 : i32
    %c0_i32_1 = arith.constant 0 : i32
    return %c0_i32, %c0_i32_0 : i32, i32
  }
  func.func @transform_3(%arg0: i32) -> (i32, i32) {
    %c0_i32 = arith.constant 0 : i32
    %c0_i32_0 = arith.constant 0 : i32
    %c0_i32_1 = arith.constant 0 : i32
    return %c0_i32, %c0_i32_0 : i32, i32
  }
  func.func @transform_4(%arg0: i32) -> (i32, i32) {
    %c0_i32 = arith.constant 0 : i32
    %c0_i32_0 = arith.constant 0 : i32
    %c0_i32_1 = arith.constant 0 : i32
    return %c0_i32, %c0_i32_0 : i32, i32
  }
  func.func @transform_5(%arg0: i32) -> (i32, i32) {
    %c0_i32 = arith.constant 0 : i32
    %c0_i32_0 = arith.constant 0 : i32
    %c0_i32_1 = arith.constant 0 : i32
    return %c0_i32, %c0_i32_0 : i32, i32
  }
  func.func @transform_6(%arg0: i32) -> (i32, i32) {
    %c0_i32 = arith.constant 0 : i32
    %c0_i32_0 = arith.constant 0 : i32
    return %arg0, %c0_i32 : i32, i32
  }
}

</mosaic_0001>

<llo_original>
// kernel: tpu_custom_call.1
$region0: #{tpu_custom_call.1}
  #allocation0 [shape = 'u32[]', space=smem, size = 0x4, offset = 0x4, fixed_abs, tag = 'smem constant byte address 0x4 - core index']
  #allocation1 [shape = 'u32[72,128]{1,0:T(1,128)}', space=vmem, size = 0x9000, scoped, tag = 'internal scratch']
  #allocation2 [shape = 'f32[32,32]{1,0:T(8,128)}', space=vmem, size = 0x4000, scoped, tag = 'scratch operand']
  #allocation3 [shape = 'f32[8,32]{1,0:T(8,128)}', space=vmem, size = 0x1000, scoped, tag = 'scratch operand']
  %s0 = inlined_call_operand.vmem [shape: f32[64,32], index: 0, kind: input, shape index: {}]
  %s1 = inlined_call_operand.vmem [shape: f32[32,32], index: 1, kind: input, shape index: {}]
  %s2 = inlined_call_operand.vmem [shape: f32[32,32], index: 2, kind: input, shape index: {}]
  %s3 = inlined_call_operand.vmem [shape: f32[1,32], index: 3, kind: input, shape index: {}]
  %s4 = inlined_call_operand.vmem [shape: f32[32,128], index: 4, kind: input, shape index: {}]
  %s5 = inlined_call_operand.vmem [shape: f32[1,128], index: 5, kind: input, shape index: {}]
  %s6 = inlined_call_operand.hbm [shape: f32[64,128], index: 6, kind: output, shape index: {}]
  %s7 = sld [smem:[#allocation0]]
  $region61: #{tpu_custom_call.1} parent=0
    _
  %s9 = ssub.s32 1, %s7
  %s10 = scalar_select 0, %s9, %s7
  $region1: #{tpu_custom_call.1} parent=0
    #allocation4 [shape = 'u8[32768]{0}', space=vmem, size = 0x8000, scoped, tag = 'output window, operand 0']
    #allocation5 [shape = 's32[2]{0}', space=sflag, size = 0x8, scoped, tag = 'scoped memory for tpu_custom_call.1']
    %11 = vsyncpa [#allocation5], 0
    %s12 = scalar_lea.sflag [#allocation5], 1
    %13 = vsyncpa %s12, 0
    loop: start=0, step=1, limit=4
    $region2: #{tpu_custom_call.1} parent=1 // loop_pre_header
      _
    $region3: #{tpu_custom_call.1} parent=1 // loop_header
      %s15 = sphi 0, %s19
      %p16 = scmp.ge.s32.totalorder %s15, 4
      %s25 = sphi 0, %s27
      %s28 = sphi 0, %s25
      %s29 = sphi 0, %s28
      %s45 = sphi 0, %s29
      %s49 = sphi 0, %s49
      %s51 = sphi 0, %s49
      %s52 = sphi 0, %s51
      %s66 = sphi 0, %s52
      %s70 = sphi 0, %s70
      %s72 = sphi 0, %s70
      %s73 = sphi 0, %s72
      %s87 = sphi 0, %s73
      %s91 = sphi 0, %s91
      %s93 = sphi 0, %s91
      %s94 = sphi 0, %s93
      %s108 = sphi 0, %s94
      %s112 = sphi 0, %s112
      %s114 = sphi 0, %s112
      %s115 = sphi 0, %s114
      %s129 = sphi 0, %s115
      %s133 = sphi 0, %s133
      %s135 = sphi 0, %s133
      %s136 = sphi 0, %s135
      %s150 = sphi 0, %s136
      %s156 = sphi 0, %s158
      %s159 = sphi 0, %s156
      %s160 = sphi 0, %s159
      %s176 = sphi 0, %s160
    $region4: #{tpu_custom_call.1} parent=1 // loop_header_branch
      %18 = sbr.rel (%p16) target = $region8
    $region5: #{tpu_custom_call.1} parent=1 // loop_body
      %s20 = ssub.s32 %s15, 1
      %s21 = ssub.s32 %s15, 2
      %s22 = sadd.s32 %s15, 1
      %s23 = ssub.s32 %s15, %s22
      %p24 = scmp.eq.s32.totalorder %s23, 0
      %s26 = sadd.s32 %s25, 1
      %s27 = scalar_select %p24, %s25, %s26
      %p30 = pneg %p24
      %p31 = scmp.eq.s32.totalorder %s15, 1
      %p32 = por %p30, %p31
      %p33 = scmp.ne.s32.totalorder %s25, %s28
      %p34 = scmp.eq.s32.totalorder %s15, 0
      %p35 = por %p33, %p34
      %p36 = scmp.ne.s32.totalorder %s25, %s28
      %p37 = scmp.eq.s32.totalorder %s20, 1
      %p38 = por %p36, %p37
      %p39 = scmp.ne.s32.totalorder %s28, %s29
      %p40 = scmp.eq.s32.totalorder %s20, 0
      %p41 = por %p39, %p40
      %p42 = scmp.ne.s32.totalorder %s28, %s29
      %p43 = scmp.eq.s32.totalorder %s21, 1
      %p44 = por %p42, %p43
      %p46 = scmp.ne.s32.totalorder %s29, %s45
      %p47 = scmp.eq.s32.totalorder %s21, 0
      %p48 = por %p46, %p47
      %s50 = sadd.s32 %s49, 1
      %p53 = scmp.eq.s32.totalorder %s15, 1
      %p54 = scmp.ne.s32.totalorder %s49, %s51
      %p55 = scmp.eq.s32.totalorder %s15, 0
      %p56 = por %p54, %p55
      %p57 = scmp.ne.s32.totalorder %s49, %s51
      %p58 = scmp.eq.s32.totalorder %s20, 1
      %p59 = por %p57, %p58
      %p60 = scmp.ne.s32.totalorder %s51, %s52
      %p61 = scmp.eq.s32.totalorder %s20, 0
      %p62 = por %p60, %p61
      %p63 = scmp.ne.s32.totalorder %s51, %s52
      %p64 = scmp.eq.s32.totalorder %s21, 1
      %p65 = por %p63, %p64
      %p67 = scmp.ne.s32.totalorder %s52, %s66
      %p68 = scmp.eq.s32.totalorder %s21, 0
      %p69 = por %p67, %p68
      %s71 = sadd.s32 %s70, 1
      %p74 = scmp.eq.s32.totalorder %s15, 1
      %p75 = scmp.ne.s32.totalorder %s70, %s72
      %p76 = scmp.eq.s32.totalorder %s15, 0
      %p77 = por %p75, %p76
      %p78 = scmp.ne.s32.totalorder %s70, %s72
      %p79 = scmp.eq.s32.totalorder %s20, 1
      %p80 = por %p78, %p79
      %p81 = scmp.ne.s32.totalorder %s72, %s73
      %p82 = scmp.eq.s32.totalorder %s20, 0
      %p83 = por %p81, %p82
      %p84 = scmp.ne.s32.totalorder %s72, %s73
      %p85 = scmp.eq.s32.totalorder %s21, 1
      %p86 = por %p84, %p85
      %p88 = scmp.ne.s32.totalorder %s73, %s87
      %p89 = scmp.eq.s32.totalorder %s21, 0
      %p90 = por %p88, %p89
      %s92 = sadd.s32 %s91, 1
      %p95 = scmp.eq.s32.totalorder %s15, 1
      %p96 = scmp.ne.s32.totalorder %s91, %s93
      %p97 = scmp.eq.s32.totalorder %s15, 0
      %p98 = por %p96, %p97
      %p99 = scmp.ne.s32.totalorder %s91, %s93
      %p100 = scmp.eq.s32.totalorder %s20, 1
      %p101 = por %p99, %p100
      %p102 = scmp.ne.s32.totalorder %s93, %s94
      %p103 = scmp.eq.s32.totalorder %s20, 0
      %p104 = por %p102, %p103
      %p105 = scmp.ne.s32.totalorder %s93, %s94
      %p106 = scmp.eq.s32.totalorder %s21, 1
      %p107 = por %p105, %p106
      %p109 = scmp.ne.s32.totalorder %s94, %s108
      %p110 = scmp.eq.s32.totalorder %s21, 0
      %p111 = por %p109, %p110
      %s113 = sadd.s32 %s112, 1
      %p116 = scmp.eq.s32.totalorder %s15, 1
      %p117 = scmp.ne.s32.totalorder %s112, %s114
      %p118 = scmp.eq.s32.totalorder %s15, 0
      %p119 = por %p117, %p118
      %p120 = scmp.ne.s32.totalorder %s112, %s114
      %p121 = scmp.eq.s32.totalorder %s20, 1
      %p122 = por %p120, %p121
      %p123 = scmp.ne.s32.totalorder %s114, %s115
      %p124 = scmp.eq.s32.totalorder %s20, 0
      %p125 = por %p123, %p124
      %p126 = scmp.ne.s32.totalorder %s114, %s115
      %p127 = scmp.eq.s32.totalorder %s21, 1
      %p128 = por %p126, %p127
      %p130 = scmp.ne.s32.totalorder %s115, %s129
      %p131 = scmp.eq.s32.totalorder %s21, 0
      %p132 = por %p130, %p131
      %s134 = sadd.s32 %s133, 1
      %p137 = scmp.eq.s32.totalorder %s15, 1
      %p138 = scmp.ne.s32.totalorder %s133, %s135
      %p139 = scmp.eq.s32.totalorder %s15, 0
      %p140 = por %p138, %p139
      %p141 = scmp.ne.s32.totalorder %s133, %s135
      %p142 = scmp.eq.s32.totalorder %s20, 1
      %p143 = por %p141, %p142
      %p144 = scmp.ne.s32.totalorder %s135, %s136
      %p145 = scmp.eq.s32.totalorder %s20, 0
      %p146 = por %p144, %p145
      %p147 = scmp.ne.s32.totalorder %s135, %s136
      %p148 = scmp.eq.s32.totalorder %s21, 1
      %p149 = por %p147, %p148
      %p151 = scmp.ne.s32.totalorder %s136, %s150
      %p152 = scmp.eq.s32.totalorder %s21, 0
      %p153 = por %p151, %p152
      %s154 = ssub.s32 %s15, %s22
      %p155 = scmp.eq.s32.totalorder %s154, 0
      %s157 = sadd.s32 %s156, 1
      %s158 = scalar_select %p155, %s156, %s157
      %p161 = pneg %p155
      %p162 = scmp.eq.s32.totalorder %s15, 1
      %p163 = por %p161, %p162
      %p164 = scmp.ne.s32.totalorder %s156, %s159
      %p165 = scmp.eq.s32.totalorder %s15, 0
      %p166 = por %p164, %p165
      %p167 = scmp.ne.s32.totalorder %s156, %s159
      %p168 = scmp.eq.s32.totalorder %s20, 1
      %p169 = por %p167, %p168
      %p170 = scmp.ne.s32.totalorder %s159, %s160
      %p171 = scmp.eq.s32.totalorder %s20, 0
      %p172 = por %p170, %p171
      %p173 = scmp.ne.s32.totalorder %s159, %s160
      %p174 = scmp.eq.s32.totalorder %s21, 1
      %p175 = por %p173, %p174
      %p177 = scmp.ne.s32.totalorder %s160, %s176
      %p178 = scmp.eq.s32.totalorder %s21, 0
      %p179 = por %p177, %p178
      %p180 = scmp.le.s32.totalorder 1, %s15
      %p181 = scmp.lt.s32.totalorder %s15, 3
      %p182 = pnand %p180, %p181
      %p183 = pneg %p182
      // Predicated region
      $region9: #{tpu_custom_call.1} parent=5 // pred_check
        _
      $region10: #{tpu_custom_call.1} parent=5 // pred_check_branch
        %185 = sbr.rel (%p182) target = $region12
      $region11: #{tpu_custom_call.1} parent=5 // pred_region
        %s186 = ssub.s32 %s15, 1
        // Predicated region
        $region13: #{tpu_custom_call.1} parent=11 // pred_check
          %p187 = pneg %p62
        $region14: #{tpu_custom_call.1} parent=11 // pred_check_branch
          %189 = sbr.rel (%p187) target = $region16
        $region15: #{tpu_custom_call.1} parent=11 // pred_region
          _
        $region16: #{tpu_custom_call.1} parent=11 // pred_fallthru
          _
        // Predicated region
        $region17: #{tpu_custom_call.1} parent=11 // pred_check
          %p190 = pneg %p83
        $region18: #{tpu_custom_call.1} parent=11 // pred_check_branch
          %192 = sbr.rel (%p190) target = $region20
        $region19: #{tpu_custom_call.1} parent=11 // pred_region
          _
        $region20: #{tpu_custom_call.1} parent=11 // pred_fallthru
          _
        // Predicated region
        $region21: #{tpu_custom_call.1} parent=11 // pred_check
          %p193 = pneg %p104
        $region22: #{tpu_custom_call.1} parent=11 // pred_check_branch
          %195 = sbr.rel (%p193) target = $region24
        $region23: #{tpu_custom_call.1} parent=11 // pred_region
          _
        $region24: #{tpu_custom_call.1} parent=11 // pred_fallthru
          _
        // Predicated region
        $region25: #{tpu_custom_call.1} parent=11 // pred_check
          %p196 = pneg %p125
        $region26: #{tpu_custom_call.1} parent=11 // pred_check_branch
          %198 = sbr.rel (%p196) target = $region28
        $region27: #{tpu_custom_call.1} parent=11 // pred_region
          _
        $region28: #{tpu_custom_call.1} parent=11 // pred_fallthru
          _
        // Predicated region
        $region29: #{tpu_custom_call.1} parent=11 // pred_check
          %p199 = pneg %p146
        $region30: #{tpu_custom_call.1} parent=11 // pred_check_branch
          %201 = sbr.rel (%p199) target = $region32
        $region31: #{tpu_custom_call.1} parent=11 // pred_region
          _
        $region32: #{tpu_custom_call.1} parent=11 // pred_fallthru
          _
      $region12: #{tpu_custom_call.1} parent=5 // pred_fallthru
        _
      %p202 = scmp.lt.s32.totalorder %s15, 2
      // Predicated region
      $region33: #{tpu_custom_call.1} parent=5 // pred_check
        %p203 = pneg %p202
      $region34: #{tpu_custom_call.1} parent=5 // pred_check_branch
        %205 = sbr.rel (%p203) target = $region36
      $region35: #{tpu_custom_call.1} parent=5 // pred_region
        // Predicated region
        $region37: #{tpu_custom_call.1} parent=35 // pred_check
          %p206 = pneg %p35
        $region38: #{tpu_custom_call.1} parent=35 // pred_check_branch
          %208 = sbr.rel (%p206) target = $region40
        $region39: #{tpu_custom_call.1} parent=35 // pred_region
          %s209 = smul.u32 4, %s15
          %p210 = scmp.lt.s32.totalorder %s209, 7
          %s211 = scalar_select %p210, %s209, 7
          %s212 = smul.addr %s211, 8
          %s213 = scalar_lea.vmem %s0, %s212
          %s214 = smul.u32 4, %s15
        $region40: #{tpu_custom_call.1} parent=35 // pred_fallthru
          _
      $region36: #{tpu_custom_call.1} parent=5 // pred_fallthru
        _
      %p215 = scmp.le.s32.totalorder 1, %s15
      %p216 = scmp.lt.s32.totalorder %s15, 3
      %p217 = pnand %p215, %p216
      %p218 = pneg %p217
      // Predicated region
      $region41: #{tpu_custom_call.1} parent=5 // pred_check
        _
      $region42: #{tpu_custom_call.1} parent=5 // pred_check_branch
        %220 = sbr.rel (%p217) target = $region44
      $region43: #{tpu_custom_call.1} parent=5 // pred_region
        %s221 = ssub.s32 %s15, 1
        %s222 = smul.u32 4, %s20
        %p223 = scmp.lt.s32.totalorder %s222, 7
        %s224 = scalar_select %p223, %s222, 7
        %s225 = smul.addr %s224, 8
        %s226 = scalar_lea.vmem %s0, %s225
        %p227 = pneg %p41
        %p228 = pneg %p38
        %p229 = pneg %p62
        %p230 = pneg %p59
        %p231 = pneg %p83
        %p232 = pneg %p80
        %p233 = pneg %p104
        %p234 = pneg %p101
        %p235 = pneg %p125
        %p236 = pneg %p122
        %p237 = pneg %p146
        %p238 = pneg %p143
        %p239 = pneg %p172
        %p240 = pneg %p169
        %s241 = sand.u32 %s159, 1
        %s242 = scalar_lea.sflag [#allocation5], %s241
        %s243 = sand.u32 %s159, 1
        %s244 = smul.addr %s243, 32
        %s245 = scalar_lea.vmem [#allocation4], %s244
        %s246 = smul.u32 4, %s20
        %p247 = scmp.lt.s32.totalorder %s246, 7
        %s248 = scalar_select %p247, %s246, 7
        %s249 = smul.addr %s248, 8
        %s250 = scalar_lea.vmem %s0, %s249
        %s251 = smul.u32 4, %s20
        %s252 = smul.u32 4, %s20
        %p253 = scmp.eq.s32.totalorder %s20, 0
        // Predicated region
        $region45: #{tpu_custom_call.1} parent=43 // pred_check
          %p254 = pneg %p253
        $region46: #{tpu_custom_call.1} parent=43 // pred_check_branch
          %256 = sbr.rel (%p254) target = $region48
        $region47: #{tpu_custom_call.1} parent=43 // pred_region
          %vm257 = vcmask 261120
          %258 = vst.msk [vmem:[#allocation3] sm:$0xff] %vm257, 0.0
        $region48: #{tpu_custom_call.1} parent=43 // pred_fallthru
          _
        %v259 = vld [vmem:[%s1] sm:$0xff]
        %v260 = vld [vmem:[%s1 + $0x8] sm:$0xff]
        %v261 = vld [vmem:[%s1 + $0x10] sm:$0xff]
        %v262 = vld [vmem:[%s1 + $0x18] sm:$0xff]
        %v263 = vld [vmem:[%s2] sm:$0xff]
        %v264 = vld [vmem:[%s2 + $0x8] sm:$0xff]
        %v265 = vld [vmem:[%s2 + $0x10] sm:$0xff]
        %v266 = vld [vmem:[%s2 + $0x18] sm:$0xff]
        %v267 = vld [vmem:[%s3] sm:$0x1]
        %v268 = vld [vmem:[%s4] sm:$0xff]
        %v269 = vld [vmem:[%s4 + $0x8] sm:$0xff]
        %v270 = vld [vmem:[%s4 + $0x10] sm:$0xff]
        %v271 = vld [vmem:[%s4 + $0x18] sm:$0xff]
        %v272 = vld [vmem:[%s5] sm:$0x1]
        %v273 = vld [vmem:[%s250] sm:$0xff]
        %v274 = vld [vmem:[%s250 + $0x8] sm:$0xff]
        %v275 = vld [vmem:[%s250 + $0x10] sm:$0xff]
        %v276 = vld [vmem:[%s250 + $0x18] sm:$0xff]
        %v278 = vperm.slane %v267, 0
        %vm280 = vcmask 261120
        %v282 = vsel %vm280, %v273, 0
        %v285 = vsel %vm280, %v274, 0
        %v288 = vsel %vm280, %v275, 0
        %v291 = vsel %vm280, %v276, 0
        %293 = vmatpush.msra.mxu0 0.0
        %294 = vmatpush.msra.mxu0 0.0
        %295 = vmatpush.msra.mxu0 0.0
        %296 = vmatpush.msra.mxu0 0.0
        %297 = vmatpush.msra.mxu0 0.0
        %298 = vmatpush.msra.mxu0 0.0
        %299 = vmatpush.msra.mxu0 0.0
        %300 = vmatpush.msra.mxu0 0.0
        %301 = vmatpush.msra.mxu0 0.0
        %302 = vmatpush.msra.mxu0 0.0
        %303 = vmatpush.msra.mxu0 0.0
        %304 = vmatpush.msra.mxu0 0.0
        %305 = vmatpush.msra.mxu0 %v262
        %306 = vmatpush.msra.mxu0 %v261
        %307 = vmatpush.msra.mxu0 %v260
        %308 = vmatpush.msra.mxu0 %v259
        %309 = vmatmul.f32.gmra.mxu0 %v282
        %v310 = vpop.f32.mrf.mxu0
        %v311 = vadd.f32 %v278, %v310
        %312 = vmatmul.f32.gmra.mxu0 %v285
        %v313 = vpop.f32.mrf.mxu0
        %v314 = vadd.f32 %v278, %v313
        %315 = vmatmul.f32.gmra.mxu0 %v288
        %v316 = vpop.f32.mrf.mxu0
        %v317 = vadd.f32 %v278, %v316
        %318 = vmatmul.f32.gmra.mxu0 %v291
        %v319 = vpop.f32.mrf.mxu0
        %v320 = vadd.f32 %v278, %v319
        %321 = vdwg.mxu0
        %322 = vst.msk [vmem:[#allocation2] sm:$0xff] %vm280, %v311
        %323 = vst.msk [vmem:[#allocation2 + $0x8] sm:$0xff] %vm280, %v314
        %324 = vst.msk [vmem:[#allocation2 + $0x10] sm:$0xff] %vm280, %v317
        %325 = vst.msk [vmem:[#allocation2 + $0x18] sm:$0xff] %vm280, %v320
        %v326 = vld [vmem:[#allocation3] sm:$0xff]
        %v327 = vld [vmem:[#allocation2] sm:$0xff]
        %v329 = vsel %vm280, %v326, 0
        %331 = vmatpush.msra.mxu0 0.0
        %332 = vmatpush.msra.mxu0 0.0
        %333 = vmatpush.msra.mxu0 0.0
        %334 = vmatpush.msra.mxu0 0.0
        %335 = vmatpush.msra.mxu0 0.0
        %336 = vmatpush.msra.mxu0 0.0
        %337 = vmatpush.msra.mxu0 0.0
        %338 = vmatpush.msra.mxu0 0.0
        %339 = vmatpush.msra.mxu0 0.0
        %340 = vmatpush.msra.mxu0 0.0
        %341 = vmatpush.msra.mxu0 0.0
        %342 = vmatpush.msra.mxu0 0.0
        %343 = vmatpush.msra.mxu0 %v266
        %344 = vmatpush.msra.mxu0 %v265
        %345 = vmatpush.msra.mxu0 %v264
        %346 = vmatpush.msra.mxu0 %v263
        %347 = vmatmul.f32.gmra.mxu0 %v329
        %v348 = vpop.f32.mrf.mxu0
        %v349 = vadd.f32 0.0, %v348
        %350 = vdwg.mxu0
        %v351 = vadd.f32 %v327, %v349
        %v352 = vtanh.pop %v351
        %353 = vst.msk [vmem:[#allocation2] sm:$0xff] %vm280, %v352
        %s354 = scalar_lea.vmem [#allocation2], 8
        %v355 = vld [vmem:[%s354] sm:$0xff]
        %v357 = vsel %vm280, %v352, 0
        %359 = vmatpush.msra.mxu0 0.0
        %360 = vmatpush.msra.mxu0 0.0
        %361 = vmatpush.msra.mxu0 0.0
        %362 = vmatpush.msra.mxu0 0.0
        %363 = vmatpush.msra.mxu0 0.0
        %364 = vmatpush.msra.mxu0 0.0
        %365 = vmatpush.msra.mxu0 0.0
        %366 = vmatpush.msra.mxu0 0.0
        %367 = vmatpush.msra.mxu0 0.0
        %368 = vmatpush.msra.mxu0 0.0
        %369 = vmatpush.msra.mxu0 0.0
        %370 = vmatpush.msra.mxu0 0.0
        %371 = vmatpush.msra.mxu0 %v266
        %372 = vmatpush.msra.mxu0 %v265
        %373 = vmatpush.msra.mxu0 %v264
        %374 = vmatpush.msra.mxu0 %v263
        %375 = vmatmul.f32.gmra.mxu0 %v357
        %v376 = vpop.f32.mrf.mxu0
        %v377 = vadd.f32 0.0, %v376
        %378 = vdwg.mxu0
        %v379 = vadd.f32 %v355, %v377
        %v380 = vtanh.pop %v379
        %381 = vst.msk [vmem:[%s354] sm:$0xff] %vm280, %v380
        %s382 = scalar_lea.vmem [#allocation2], 16
        %v383 = vld [vmem:[%s382] sm:$0xff]
        %v385 = vsel %vm280, %v380, 0
        %387 = vmatpush.msra.mxu0 0.0
        %388 = vmatpush.msra.mxu0 0.0
        %389 = vmatpush.msra.mxu0 0.0
        %390 = vmatpush.msra.mxu0 0.0
        %391 = vmatpush.msra.mxu0 0.0
        %392 = vmatpush.msra.mxu0 0.0
        %393 = vmatpush.msra.mxu0 0.0
        %394 = vmatpush.msra.mxu0 0.0
        %395 = vmatpush.msra.mxu0 0.0
        %396 = vmatpush.msra.mxu0 0.0
        %397 = vmatpush.msra.mxu0 0.0
        %398 = vmatpush.msra.mxu0 0.0
        %399 = vmatpush.msra.mxu0 %v266
        %400 = vmatpush.msra.mxu0 %v265
        %401 = vmatpush.msra.mxu0 %v264
        %402 = vmatpush.msra.mxu0 %v263
        %403 = vmatmul.f32.gmra.mxu0 %v385
        %v404 = vpop.f32.mrf.mxu0
        %v405 = vadd.f32 0.0, %v404
        %406 = vdwg.mxu0
        %v407 = vadd.f32 %v383, %v405
        %v408 = vtanh.pop %v407
        %409 = vst.msk [vmem:[%s382] sm:$0xff] %vm280, %v408
        %s410 = scalar_lea.vmem [#allocation2], 24
        %v411 = vld [vmem:[%s410] sm:$0xff]
        %v413 = vsel %vm280, %v408, 0
        %415 = vmatpush.msra.mxu0 0.0
        %416 = vmatpush.msra.mxu0 0.0
        %417 = vmatpush.msra.mxu0 0.0
        %418 = vmatpush.msra.mxu0 0.0
        %419 = vmatpush.msra.mxu0 0.0
        %420 = vmatpush.msra.mxu0 0.0
        %421 = vmatpush.msra.mxu0 0.0
        %422 = vmatpush.msra.mxu0 0.0
        %423 = vmatpush.msra.mxu0 0.0
        %424 = vmatpush.msra.mxu0 0.0
        %425 = vmatpush.msra.mxu0 0.0
        %426 = vmatpush.msra.mxu0 0.0
        %427 = vmatpush.msra.mxu0 %v266
        %428 = vmatpush.msra.mxu0 %v265
        %429 = vmatpush.msra.mxu0 %v264
        %430 = vmatpush.msra.mxu0 %v263
        %431 = vmatmul.f32.gmra.mxu0 %v413
        %v432 = vpop.f32.mrf.mxu0
        %v433 = vadd.f32 0.0, %v432
        %434 = vdwg.mxu0
        %v435 = vadd.f32 %v411, %v433
        %v436 = vtanh.pop %v435
        %437 = vst.msk [vmem:[%s410] sm:$0xff] %vm280, %v436
        %438 = vst.msk [vmem:[#allocation3] sm:$0xff] %vm280, %v436
        %v439 = vld [vmem:[#allocation2] sm:$0xff]
        %v440 = vld [vmem:[#allocation2 + $0x8] sm:$0xff]
        %v441 = vld [vmem:[#allocation2 + $0x10] sm:$0xff]
        %v442 = vld [vmem:[#allocation2 + $0x18] sm:$0xff]
        %v444 = vperm.slane %v272, 0
        %v447 = vsel %vm280, %v439, 0
        %v450 = vsel %vm280, %v440, 0
        %v453 = vsel %vm280, %v441, 0
        %v456 = vsel %vm280, %v442, 0
        %458 = vmatpush.msra.mxu0 0.0
        %459 = vmatpush.msra.mxu0 0.0
        %460 = vmatpush.msra.mxu0 0.0
        %461 = vmatpush.msra.mxu0 0.0
        %462 = vmatpush.msra.mxu0 0.0
        %463 = vmatpush.msra.mxu0 0.0
        %464 = vmatpush.msra.mxu0 0.0
        %465 = vmatpush.msra.mxu0 0.0
        %466 = vmatpush.msra.mxu0 0.0
        %467 = vmatpush.msra.mxu0 0.0
        %468 = vmatpush.msra.mxu0 0.0
        %469 = vmatpush.msra.mxu0 0.0
        %470 = vmatpush.msra.mxu0 %v271
        %471 = vmatpush.msra.mxu0 %v270
        %472 = vmatpush.msra.mxu0 %v269
        %473 = vmatpush.msra.mxu0 %v268
        %474 = vmatmul.f32.gmra.mxu0 %v447
        %v475 = vpop.f32.mrf.mxu0
        %v476 = vadd.f32 %v444, %v475
        %477 = vmatmul.f32.gmra.mxu0 %v450
        %v478 = vpop.f32.mrf.mxu0
        %v479 = vadd.f32 %v444, %v478
        %480 = vmatmul.f32.gmra.mxu0 %v453
        %v481 = vpop.f32.mrf.mxu0
        %v482 = vadd.f32 %v444, %v481
        %483 = vmatmul.f32.gmra.mxu0 %v456
        %v484 = vpop.f32.mrf.mxu0
        %v485 = vadd.f32 %v444, %v484
        %486 = vdwg.mxu0
        %487 = vst [vmem:[%s245] sm:$0xff] %v476
        %488 = vst [vmem:[%s245 + $0x8] sm:$0xff] %v479
        %489 = vst [vmem:[%s245 + $0x10] sm:$0xff] %v482
        %490 = vst [vmem:[%s245 + $0x18] sm:$0xff] %v485
        %s491 = sand.u32 %s159, 1
        %s492 = scalar_lea.sflag [#allocation5], %s491
        %s493 = sand.u32 %s159, 1
        %s494 = smul.addr %s493, 32
        %s495 = scalar_lea.vmem [#allocation4], %s494
        // Predicated region
        $region49: #{tpu_custom_call.1} parent=43 // pred_check
          %p496 = pneg %p169
        $region50: #{tpu_custom_call.1} parent=43 // pred_check_branch
          %498 = sbr.rel (%p496) target = $region52
        $region51: #{tpu_custom_call.1} parent=43 // pred_region
          %s499 = smul.u32 4, %s20
          %501 = vsyncadd %s492, 0
          %s502 = smul.addr %s499, 8
          %s503 = scalar_lea.hbm %s6, %s502
          %s504 = sshll.u32 %s495, 4
          %s505 = int_to_ptr.vmem [resolvable:$true] %s504
          %s506 = sshll.u32 %s503, 4
          %s507 = int_to_ptr.hbm [resolvable:$true] %s506
          %512 = dma.vmem_to_hbm [thread:$0]  %s505, 512, %s507, %s492, 128, 128, 8
        $region52: #{tpu_custom_call.1} parent=43 // pred_fallthru
          _
      $region44: #{tpu_custom_call.1} parent=5 // pred_fallthru
        _
      %p513 = scmp.le.s32.totalorder 2, %s15
      // Predicated region
      $region53: #{tpu_custom_call.1} parent=5 // pred_check
        %p514 = pneg %p513
      $region54: #{tpu_custom_call.1} parent=5 // pred_check_branch
        %516 = sbr.rel (%p514) target = $region56
      $region55: #{tpu_custom_call.1} parent=5 // pred_region
        %s517 = ssub.s32 %s15, 2
        // Predicated region
        $region57: #{tpu_custom_call.1} parent=55 // pred_check
          %p518 = pneg %p175
        $region58: #{tpu_custom_call.1} parent=55 // pred_check_branch
          %520 = sbr.rel (%p518) target = $region60
        $region59: #{tpu_custom_call.1} parent=55 // pred_region
          %s521 = sand.u32 %s160, 1
          %s522 = scalar_lea.sflag [#allocation5], %s521
          %s523 = sand.u32 %s160, 1
          %s524 = smul.addr %s523, 32
          %s525 = scalar_lea.vmem [#allocation4], %s524
          %527 = dma.done %s522, 512
        $region60: #{tpu_custom_call.1} parent=55 // pred_fallthru
          _
      $region56: #{tpu_custom_call.1} parent=5 // pred_fallthru
        _
    $region6: #{tpu_custom_call.1} parent=1 // loop_footer
      %s19 = sadd.s32 1, %s15
    $region7: #{tpu_custom_call.1} parent=1 // loop_footer_branch
      %14 = sbr.rel target = $region3
    $region8: #{tpu_custom_call.1} parent=1 // loop_exit
      _
    %528 = vsyncpa [#allocation5], 1
    %s529 = scalar_lea.sflag [#allocation5], 1
    %530 = vsyncpa %s529, 1

</llo_original>
